<compile_context>
chip_gen: v7x
topology: tpu7x:2x2x1
jax: 0.10.0
libtpu: 0.0.40
codegen_flags: <defaults>
</compile_context>

<pallas_src>
import jax
import jax.numpy as jnp
from jax.experimental import pallas as pl
from jax.experimental.pallas import tpu as pltpu


def _rope_kernel(pos_ref, inv_freq_ref, x_ref, out_ref):
    """Fused RoPE on one (tR, D) row tile.

    pos_ref      : (tR, 1) f32  token positions
    inv_freq_ref : (1, D)  f32  theta**(-2k/D), odd lanes negated
    x_ref        : (tR, D)      input rows
    out_ref      : (tR, D)      rotated output rows
    """
    x = x_ref[...].astype(jnp.float32)            # (tR, D)
    pos = pos_ref[...]                            # (tR, 1)
    inv_freq = inv_freq_ref[...]                  # (1, D)
    D = x.shape[-1]

    # angle[r, 2k]   = +pos[r] * theta**(-2k/D)
    # angle[r, 2k+1] = -pos[r] * theta**(-2k/D)
    # cos is even -> c is the usual pair-duplicated cos.
    # sin is odd  -> s already carries the (+even / -odd... pre-swap) sign, so
    # no per-element parity select / sign multiply is needed afterwards.
    angle = pos * inv_freq                        # one VALU mul (broadcast)
    c = jnp.cos(angle)
    s = jnp.sin(angle)

    t = x * s
    t_next = pltpu.roll(t, shift=D - 1, axis=1)   # t_next[i] = t[(i + 1) % D]
    t_prev = pltpu.roll(t, shift=1, axis=1)       # t_prev[i] = t[(i - 1) % D]

    # Pair swap: even lanes take their right neighbour, odd lanes their left.
    # Mask built once at (1, D) and broadcast inside the select (not a
    # per-element iota chain).  Wraparound lanes are never selected.
    lane = jax.lax.broadcasted_iota(jnp.int32, (1, D), 1)
    is_even = (lane & 1) == 0
    swap_t = jnp.where(is_even, t_next, t_prev)

    # out[2k]   = x[2k]*cos - x[2k+1]*sin
    # out[2k+1] = x[2k+1]*cos + x[2k]*sin
    out_ref[...] = (x * c + swap_t).astype(out_ref.dtype)


def _choose_row_tile(n_rows, d):
    """Row-tile size: large lane-dense blocks, VMEM-safe on v5e/v6e/v7x."""
    MAX_TILE_ELEMS = 256 * 1024          # 1 MiB f32 / 512 KiB bf16 per block
    tr = max(1, MAX_TILE_ELEMS // d)
    tr = min(tr, 4096)                   # keep f32 temporaries inside VMEM
    if tr >= n_rows:
        if n_rows >= 16:
            # Split so the 'parallel' grid has >=2 steps (both v7x TCs busy).
            return ((n_rows + 1) // 2 + 7) // 8 * 8
        return n_rows                    # full extent — always a legal block
    return max(8, (tr // 8) * 8)         # partial tiles must be 8-row aligned


def rope_forward(x, token_positions, theta):
    """Apply RoPE.  x: (..., S, D); token_positions broadcastable to x.shape[:-1]."""
    orig_shape = x.shape
    D = orig_shape[-1]
    N = 1
    for dim in orig_shape[:-1]:
        N *= dim

    x2 = x.reshape(N, D)

    # Positions are used in f32: exact up to 2**24 (plenty for real contexts).
    tp = jnp.broadcast_to(jnp.asarray(token_positions), orig_shape[:-1])
    pos = tp.reshape(N, 1).astype(jnp.float32)

    # inv_freq[2k] = +theta**(-2k/D), inv_freq[2k+1] = -theta**(-2k/D).
    # Multiply (not divide) by it to get the angle; the negated odd lanes fold
    # the post-swap sign into sin() for free (cos is even, unaffected).
    k = jnp.arange(D // 2, dtype=jnp.float32)
    base = 1.0 / jnp.power(jnp.float32(theta), 2.0 * k / jnp.float32(D))
    signs = jnp.array([1.0, -1.0], dtype=jnp.float32)
    inv_freq = (base[:, None] * signs[None, :]).reshape(1, D)

    tR = _choose_row_tile(N, D)
    grid = (pl.cdiv(N, tR),)

    out = pl.pallas_call(
        _rope_kernel,
        out_shape=jax.ShapeDtypeStruct((N, D), x.dtype),
        grid=grid,
        in_specs=[
            pl.BlockSpec((tR, 1), lambda r: (r, 0)),    # positions
            pl.BlockSpec((1, D), lambda r: (0, 0)),     # signed inv_freq
            pl.BlockSpec((tR, D), lambda r: (r, 0)),    # x rows (lane-dense)
        ],
        out_specs=pl.BlockSpec((tR, D), lambda r: (r, 0)),
        compiler_params=pltpu.CompilerParams(
            dimension_semantics=("parallel",)),
    )(pos, inv_freq, x2)

    return out.reshape(orig_shape)


# ----------------------------------------------------------------------------
# Pure-JAX reference mirroring the PyTorch module exactly (for self-check).
# ----------------------------------------------------------------------------
def _make_rope_tables(theta: float, d_k: int, max_seq_len: int):
    i = jnp.arange(max_seq_len, dtype=jnp.float32)[:, None]          # (S_max, 1)
    k = jnp.arange(d_k // 2, dtype=jnp.float32)[None, :]             # (1, d_k//2)
    theta_ik = i / jnp.power(jnp.float32(theta), 2.0 * k / d_k)      # (S_max, d_k//2)
    return jnp.cos(theta_ik), jnp.sin(theta_ik)


def rope_reference(x, token_positions, cos_val, sin_val):
    B, S, D = x.shape
    Dh = D // 2
    cos_rot = cos_val[token_positions]
    sin_rot = sin_val[token_positions]
    x_pair = x.reshape(B, S, Dh, 2)
    x_even, x_odd = x_pair[..., 0], x_pair[..., 1]
    x_rot_even = x_even * cos_rot - x_odd * sin_rot
    x_rot_odd = x_even * sin_rot + x_odd * cos_rot
    return jnp.stack([x_rot_even, x_rot_odd], axis=-1).reshape(B, S, D)


def _check(batch, seq, d_k, theta, max_seq_len, seed):
    key = jax.random.PRNGKey(seed)
    kx, kp = jax.random.split(key)
    x = jax.random.normal(kx, (batch, seq, d_k), dtype=jnp.float32)
    token_positions = jax.random.randint(
        kp, (batch, seq), minval=0, maxval=max_seq_len, dtype=jnp.int32)

    out = rope_forward(x, token_positions, theta)
    out = jax.block_until_ready(out)

    cos_val, sin_val = _make_rope_tables(theta, d_k, max_seq_len)
    ref = rope_reference(x, token_positions, cos_val, sin_val)

    assert out.shape == x.shape and out.dtype == x.dtype
    err = float(jnp.max(jnp.abs(out - ref)))
    assert jnp.allclose(out, ref, atol=1e-4, rtol=1e-5), err


if __name__ == "__main__":
    theta = 10000.0
    d_k = 128          # typical RoPE head dim; lane-dense blocks
    max_seq_len = 16

    # Small canonical shape (2-step parallel grid, whole-tile rows).
    _check(batch=2, seq=8, d_k=d_k, theta=theta, max_seq_len=max_seq_len, seed=0)
    # Ragged row count (N=21 -> tR=16, partial last tile) per review concern.
    _check(batch=3, seq=7, d_k=d_k, theta=theta, max_seq_len=max_seq_len, seed=1)

    print("KERNEL_OK")
</pallas_src>

<mosaic_0001>
module attributes {stable_mosaic.version = 11 : i64} {
  func.func @_rope_kernel(%arg0: i32, %arg1: memref<8x1xf32, #tpu.memory_space<vmem>>, %arg2: memref<1x128xf32, #tpu.memory_space<vmem>>, %arg3: memref<8x128xf32, #tpu.memory_space<vmem>>, %arg4: memref<8x128xf32, #tpu.memory_space<vmem>>) attributes {dimension_semantics = [#tpu.dimension_semantics<parallel>], iteration_bounds = array<i64: 2>, scalar_prefetch = 0 : i64, scratch_operands = 0 : i64, tpu.core_type = #tpu.core_type<tc>, window_params = [{transform_indices = @transform_0, window_bounds = array<i64: 8, 1>}, {pipeline_mode = #tpu.pipeline_mode<synchronous>, transform_indices = @transform_1, window_bounds = array<i64: 1, 128>}, {transform_indices = @transform_2, window_bounds = array<i64: 8, 128>}, {transform_indices = @transform_3, window_bounds = array<i64: 8, 128>}]} {
    %c0 = arith.constant 0 : index
    %c0_0 = arith.constant 0 : index
    %0 = vector.load %arg3[%c0, %c0_0] : memref<8x128xf32, #tpu.memory_space<vmem>>, vector<8x128xf32>
    %c0_1 = arith.constant 0 : index
    %c0_2 = arith.constant 0 : index
    %1 = vector.load %arg1[%c0_1, %c0_2] : memref<8x1xf32, #tpu.memory_space<vmem>>, vector<8x1xf32>
    %c0_3 = arith.constant 0 : index
    %c0_4 = arith.constant 0 : index
    %2 = vector.load %arg2[%c0_3, %c0_4] : memref<1x128xf32, #tpu.memory_space<vmem>>, vector<1x128xf32>
    %3 = vector.broadcast %1 : vector<8x1xf32> to vector<8x128xf32>
    %4 = vector.broadcast %2 : vector<1x128xf32> to vector<8x128xf32>
    %5 = arith.mulf %3, %4 : vector<8x128xf32>
    %6 = math.cos %5 : vector<8x128xf32>
    %7 = math.sin %5 : vector<8x128xf32>
    %8 = arith.mulf %0, %7 : vector<8x128xf32>
    %c127_i32 = arith.constant 127 : i32
    %9 = tpu.dynamic_rotate %8 by %c127_i32 dim 1 : vector<8x128xf32>, i32 -> vector<8x128xf32>
    %c1_i32 = arith.constant 1 : i32
    %10 = tpu.dynamic_rotate %8 by %c1_i32 dim 1 : vector<8x128xf32>, i32 -> vector<8x128xf32>
    %11 = tpu.iota {dimensions = array<i32: 1>} : vector<1x128xi32>
    %c1_i32_5 = arith.constant 1 : i32
    %12 = vector.broadcast %c1_i32_5 : i32 to vector<1x128xi32>
    %13 = arith.andi %11, %12 : vector<1x128xi32>
    %c0_i32 = arith.constant 0 : i32
    %14 = vector.broadcast %c0_i32 : i32 to vector<1x128xi32>
    %15 = arith.cmpi eq, %13, %14 : vector<1x128xi32>
    %16 = vector.shape_cast %15 : vector<1x128xi1> to vector<1x128xi1>
    %17 = vector.broadcast %16 : vector<1x128xi1> to vector<8x128xi1>
    %18 = arith.select %17, %9, %10 : vector<8x128xi1>, vector<8x128xf32>
    %19 = arith.mulf %0, %6 : vector<8x128xf32>
    %20 = arith.addf %19, %18 : vector<8x128xf32>
    %c0_6 = arith.constant 0 : index
    %c0_7 = arith.constant 0 : index
    %21 = vector.load %arg4[%c0_6, %c0_7] : memref<8x128xf32, #tpu.memory_space<vmem>>, vector<8x128xf32>
    tpu.vector_store %arg4[%c0_6, %c0_7], %20 {strides = array<i32>} : memref<8x128xf32, #tpu.memory_space<vmem>>, vector<8x128xf32>,
    return
  }
  func.func @transform_0(%arg0: i32) -> (i32, i32) {
    %c0_i32 = arith.constant 0 : i32
    %c0_i32_0 = arith.constant 0 : i32
    return %arg0, %c0_i32 : i32, i32
  }
  func.func @transform_1(%arg0: i32) -> (i32, i32) {
    %c0_i32 = arith.constant 0 : i32
    %c0_i32_0 = arith.constant 0 : i32
    %c0_i32_1 = arith.constant 0 : i32
    return %c0_i32, %c0_i32_0 : i32, i32
  }
  func.func @transform_2(%arg0: i32) -> (i32, i32) {
    %c0_i32 = arith.constant 0 : i32
    %c0_i32_0 = arith.constant 0 : i32
    return %arg0, %c0_i32 : i32, i32
  }
  func.func @transform_3(%arg0: i32) -> (i32, i32) {
    %c0_i32 = arith.constant 0 : i32
    %c0_i32_0 = arith.constant 0 : i32
    return %arg0, %c0_i32 : i32, i32
  }
}

</mosaic_0001>

<llo_original>
// kernel: tpu_custom_call.1
$region0: #{tpu_custom_call.1}
  #allocation0 [shape = 'u32[]', space=smem, size = 0x4, offset = 0x4, fixed_abs, tag = 'smem constant byte address 0x4 - core index']
  #allocation1 [shape = 'u32[144,128]{1,0:T(1,128)}', space=vmem, size = 0x12000, scoped, tag = 'internal scratch']
  %s0 = inlined_call_operand.vmem [shape: f32[16,1], index: 0, kind: input, shape index: {}]
  %s1 = inlined_call_operand.vmem [shape: f32[1,128], index: 1, kind: input, shape index: {}]
  %s2 = inlined_call_operand.vmem [shape: f32[16,128], index: 2, kind: input, shape index: {}]
  %s3 = inlined_call_operand.hbm [shape: f32[16,128], index: 3, kind: output, shape index: {}]
  %s4 = sld [smem:[#allocation0]]
  $region45: #{tpu_custom_call.1} parent=0
    _
  %s6 = ssub.s32 1, %s4
  %s7 = scalar_select 0, %s6, %s4
  $region1: #{tpu_custom_call.1} parent=0
    #allocation2 [shape = 'u8[8192]{0}', space=vmem, size = 0x2000, scoped, tag = 'output window, operand 0']
    #allocation3 [shape = 's32[2]{0}', space=sflag, size = 0x8, scoped, tag = 'scoped memory for tpu_custom_call.1']
    %8 = vsyncpa [#allocation3], 0
    %s9 = scalar_lea.sflag [#allocation3], 1
    %10 = vsyncpa %s9, 0
    loop: start=0, step=1, limit=4
    $region2: #{tpu_custom_call.1} parent=1 // loop_pre_header
      _
    $region3: #{tpu_custom_call.1} parent=1 // loop_header
      %s12 = sphi 0, %s16
      %p13 = scmp.ge.s32.totalorder %s12, 4
      %s22 = sphi 0, %s24
      %s25 = sphi 0, %s22
      %s26 = sphi 0, %s25
      %s42 = sphi 0, %s26
      %s46 = sphi 0, %s46
      %s48 = sphi 0, %s46
      %s49 = sphi 0, %s48
      %s63 = sphi 0, %s49
      %s69 = sphi 0, %s71
      %s72 = sphi 0, %s69
      %s73 = sphi 0, %s72
      %s89 = sphi 0, %s73
      %s95 = sphi 0, %s97
      %s98 = sphi 0, %s95
      %s99 = sphi 0, %s98
      %s115 = sphi 0, %s99
    $region4: #{tpu_custom_call.1} parent=1 // loop_header_branch
      %15 = sbr.rel (%p13) target = $region8
    $region5: #{tpu_custom_call.1} parent=1 // loop_body
      %s17 = ssub.s32 %s12, 1
      %s18 = ssub.s32 %s12, 2
      %s19 = sadd.s32 %s12, 1
      %s20 = ssub.s32 %s12, %s19
      %p21 = scmp.eq.s32.totalorder %s20, 0
      %s23 = sadd.s32 %s22, 1
      %s24 = scalar_select %p21, %s22, %s23
      %p27 = pneg %p21
      %p28 = scmp.eq.s32.totalorder %s12, 1
      %p29 = por %p27, %p28
      %p30 = scmp.ne.s32.totalorder %s22, %s25
      %p31 = scmp.eq.s32.totalorder %s12, 0
      %p32 = por %p30, %p31
      %p33 = scmp.ne.s32.totalorder %s22, %s25
      %p34 = scmp.eq.s32.totalorder %s17, 1
      %p35 = por %p33, %p34
      %p36 = scmp.ne.s32.totalorder %s25, %s26
      %p37 = scmp.eq.s32.totalorder %s17, 0
      %p38 = por %p36, %p37
      %p39 = scmp.ne.s32.totalorder %s25, %s26
      %p40 = scmp.eq.s32.totalorder %s18, 1
      %p41 = por %p39, %p40
      %p43 = scmp.ne.s32.totalorder %s26, %s42
      %p44 = scmp.eq.s32.totalorder %s18, 0
      %p45 = por %p43, %p44
      %s47 = sadd.s32 %s46, 1
      %p50 = scmp.eq.s32.totalorder %s12, 1
      %p51 = scmp.ne.s32.totalorder %s46, %s48
      %p52 = scmp.eq.s32.totalorder %s12, 0
      %p53 = por %p51, %p52
      %p54 = scmp.ne.s32.totalorder %s46, %s48
      %p55 = scmp.eq.s32.totalorder %s17, 1
      %p56 = por %p54, %p55
      %p57 = scmp.ne.s32.totalorder %s48, %s49
      %p58 = scmp.eq.s32.totalorder %s17, 0
      %p59 = por %p57, %p58
      %p60 = scmp.ne.s32.totalorder %s48, %s49
      %p61 = scmp.eq.s32.totalorder %s18, 1
      %p62 = por %p60, %p61
      %p64 = scmp.ne.s32.totalorder %s49, %s63
      %p65 = scmp.eq.s32.totalorder %s18, 0
      %p66 = por %p64, %p65
      %s67 = ssub.s32 %s12, %s19
      %p68 = scmp.eq.s32.totalorder %s67, 0
      %s70 = sadd.s32 %s69, 1
      %s71 = scalar_select %p68, %s69, %s70
      %p74 = pneg %p68
      %p75 = scmp.eq.s32.totalorder %s12, 1
      %p76 = por %p74, %p75
      %p77 = scmp.ne.s32.totalorder %s69, %s72
      %p78 = scmp.eq.s32.totalorder %s12, 0
      %p79 = por %p77, %p78
      %p80 = scmp.ne.s32.totalorder %s69, %s72
      %p81 = scmp.eq.s32.totalorder %s17, 1
      %p82 = por %p80, %p81
      %p83 = scmp.ne.s32.totalorder %s72, %s73
      %p84 = scmp.eq.s32.totalorder %s17, 0
      %p85 = por %p83, %p84
      %p86 = scmp.ne.s32.totalorder %s72, %s73
      %p87 = scmp.eq.s32.totalorder %s18, 1
      %p88 = por %p86, %p87
      %p90 = scmp.ne.s32.totalorder %s73, %s89
      %p91 = scmp.eq.s32.totalorder %s18, 0
      %p92 = por %p90, %p91
      %s93 = ssub.s32 %s12, %s19
      %p94 = scmp.eq.s32.totalorder %s93, 0
      %s96 = sadd.s32 %s95, 1
      %s97 = scalar_select %p94, %s95, %s96
      %p100 = pneg %p94
      %p101 = scmp.eq.s32.totalorder %s12, 1
      %p102 = por %p100, %p101
      %p103 = scmp.ne.s32.totalorder %s95, %s98
      %p104 = scmp.eq.s32.totalorder %s12, 0
      %p105 = por %p103, %p104
      %p106 = scmp.ne.s32.totalorder %s95, %s98
      %p107 = scmp.eq.s32.totalorder %s17, 1
      %p108 = por %p106, %p107
      %p109 = scmp.ne.s32.totalorder %s98, %s99
      %p110 = scmp.eq.s32.totalorder %s17, 0
      %p111 = por %p109, %p110
      %p112 = scmp.ne.s32.totalorder %s98, %s99
      %p113 = scmp.eq.s32.totalorder %s18, 1
      %p114 = por %p112, %p113
      %p116 = scmp.ne.s32.totalorder %s99, %s115
      %p117 = scmp.eq.s32.totalorder %s18, 0
      %p118 = por %p116, %p117
      %p119 = scmp.le.s32.totalorder 1, %s12
      %p120 = scmp.lt.s32.totalorder %s12, 3
      %p121 = pnand %p119, %p120
      %p122 = pneg %p121
      // Predicated region
      $region9: #{tpu_custom_call.1} parent=5 // pred_check
        _
      $region10: #{tpu_custom_call.1} parent=5 // pred_check_branch
        %124 = sbr.rel (%p121) target = $region12
      $region11: #{tpu_custom_call.1} parent=5 // pred_region
        %s125 = ssub.s32 %s12, 1
        // Predicated region
        $region13: #{tpu_custom_call.1} parent=11 // pred_check
          %p126 = pneg %p59
        $region14: #{tpu_custom_call.1} parent=11 // pred_check_branch
          %128 = sbr.rel (%p126) target = $region16
        $region15: #{tpu_custom_call.1} parent=11 // pred_region
          _
        $region16: #{tpu_custom_call.1} parent=11 // pred_fallthru
          _
      $region12: #{tpu_custom_call.1} parent=5 // pred_fallthru
        _
      %p129 = scmp.lt.s32.totalorder %s12, 2
      // Predicated region
      $region17: #{tpu_custom_call.1} parent=5 // pred_check
        %p130 = pneg %p129
      $region18: #{tpu_custom_call.1} parent=5 // pred_check_branch
        %132 = sbr.rel (%p130) target = $region20
      $region19: #{tpu_custom_call.1} parent=5 // pred_region
        // Predicated region
        $region21: #{tpu_custom_call.1} parent=19 // pred_check
          %p133 = pneg %p32
        $region22: #{tpu_custom_call.1} parent=19 // pred_check_branch
          %135 = sbr.rel (%p133) target = $region24
        $region23: #{tpu_custom_call.1} parent=19 // pred_region
          %p136 = scmp.lt.s32.totalorder %s12, 1
          %s137 = scalar_select %p136, %s12, 1
          %s138 = smul.addr %s137, 8
          %s139 = scalar_lea.vmem %s0, %s138
        $region24: #{tpu_custom_call.1} parent=19 // pred_fallthru
          _
        // Predicated region
        $region25: #{tpu_custom_call.1} parent=19 // pred_check
          %p140 = pneg %p79
        $region26: #{tpu_custom_call.1} parent=19 // pred_check_branch
          %142 = sbr.rel (%p140) target = $region28
        $region27: #{tpu_custom_call.1} parent=19 // pred_region
          %p143 = scmp.lt.s32.totalorder %s12, 1
          %s144 = scalar_select %p143, %s12, 1
          %s145 = smul.addr %s144, 8
          %s146 = scalar_lea.vmem %s2, %s145
        $region28: #{tpu_custom_call.1} parent=19 // pred_fallthru
          _
      $region20: #{tpu_custom_call.1} parent=5 // pred_fallthru
        _
      %p147 = scmp.le.s32.totalorder 1, %s12
      %p148 = scmp.lt.s32.totalorder %s12, 3
      %p149 = pnand %p147, %p148
      %p150 = pneg %p149
      // Predicated region
      $region29: #{tpu_custom_call.1} parent=5 // pred_check
        _
      $region30: #{tpu_custom_call.1} parent=5 // pred_check_branch
        %152 = sbr.rel (%p149) target = $region32
      $region31: #{tpu_custom_call.1} parent=5 // pred_region
        %s153 = ssub.s32 %s12, 1
        %p154 = scmp.lt.s32.totalorder %s17, 1
        %s155 = scalar_select %p154, %s17, 1
        %s156 = smul.addr %s155, 8
        %s157 = scalar_lea.vmem %s0, %s156
        %p158 = pneg %p38
        %p159 = pneg %p35
        %p160 = pneg %p59
        %p161 = pneg %p56
        %p162 = scmp.lt.s32.totalorder %s17, 1
        %s163 = scalar_select %p162, %s17, 1
        %s164 = smul.addr %s163, 8
        %s165 = scalar_lea.vmem %s2, %s164
        %p166 = pneg %p85
        %p167 = pneg %p82
        %p168 = pneg %p111
        %p169 = pneg %p108
        %s170 = sand.u32 %s98, 1
        %s171 = scalar_lea.sflag [#allocation3], %s170
        %s172 = sand.u32 %s98, 1
        %s173 = smul.addr %s172, 8
        %s174 = scalar_lea.vmem [#allocation2], %s173
        %p175 = scmp.lt.s32.totalorder %s17, 1
        %s176 = scalar_select %p175, %s17, 1
        %s177 = smul.addr %s176, 8
        %s178 = scalar_lea.vmem %s0, %s177
        %p179 = scmp.lt.s32.totalorder %s17, 1
        %s180 = scalar_select %p179, %s17, 1
        %s181 = smul.addr %s180, 8
        %s182 = scalar_lea.vmem %s2, %s181
        %v183 = vld [vmem:[%s182] sm:$0xff]
        %v184 = vld [vmem:[%s178] sm:$0xff]
        %v185 = vld [vmem:[%s1] sm:$0x1]
        %187 = vset.pattern.permute.xlu0 0
        %188 = vperm.xlu0 %187, %v184
        %v189 = vpop.permute.xlu0 %188
        %v192 = vlaneseq
        %v193 = vshrl.u32 %v192, 7
        %v194 = vsub.s32 0, %v193
        %v195 = vrot.slane %v185, %v194
        %v197 = vmul.f32 %v189, %v195
        %v198 = vand.u32 2147483647, %v197
        %vm199 = vcmp.le.f32.partialorder %v198, 0.7853982
        %vm200 = vcmp.lt.s32.totalorder %v197, 0
        %v201 = vand.u32 %v197, 2139095040
        %v202 = vshrl.u32 %v201, 23
        %v203 = vsub.s32 %v202, 127
        %v204 = vand.u32 2147483647, %v197
        %v205 = vand.u32 %v204, 8388607
        %v206 = vor.u32 %v205, 8388608
        %v207 = vsub.s32 0, %v206
        %v208 = vadd.s32 %v203, 1
        %vm209 = vcmp.gt.s32.totalorder %v208, 0
        %v210 = vsel %vm209, %v208, 0
        %v211 = vshrl.u32 %v210, 5
        %v212 = vand.u32 %v210, 31
        %v213 = vsub.s32 32, %v212
        %v214 = vshrl.u32 683565275, %v213
        %v215 = vshll.u32 683565275, %v212
        %v216 = vshrl.u32 2475754826, %v213
        %v217 = vor.u32 %v215, %v216
        %v218 = vshll.u32 2475754826, %v212
        %v219 = vshrl.u32 2131351028, %v213
        %v220 = vor.u32 %v218, %v219
        %v221 = vshll.u32 2131351028, %v212
        %v222 = vshrl.u32 2102212464, %v213
        %v223 = vor.u32 %v221, %v222
        %v224 = vshll.u32 2102212464, %v212
        %v225 = vshrl.u32 920167782, %v213
        %v226 = vor.u32 %v224, %v225
        %v227 = vshll.u32 920167782, %v212
        %v228 = vshrl.u32 1326507024, %v213
        %v229 = vor.u32 %v227, %v228
        %vm230 = vcmp.lt.s32.totalorder %v211, 1
        %vm231 = vcmp.lt.s32.totalorder %v211, 2
        %vm232 = vcmp.lt.s32.totalorder %v211, 3
        %vm233 = vcmp.lt.s32.totalorder %v211, 4
        %v234 = vsel %vm230, %v214, %v217
        %v235 = vsel %vm233, %v223, 2102212464
        %v236 = vsel %vm232, %v220, %v235
        %v237 = vsel %vm231, %v234, %v236
        %v238 = vsel %vm230, %v217, %v220
        %v239 = vsel %vm233, %v226, 920167782
        %v240 = vsel %vm232, %v223, %v239
        %v241 = vsel %vm231, %v238, %v240
        %v242 = vsel %vm230, %v220, %v223
        %v243 = vsel %vm233, %v229, 1326507024
        %v244 = vsel %vm232, %v226, %v243
        %v245 = vsel %vm231, %v242, %v244
        %v246 = vshll.u32 %v206, 8
        %v247 = vmul.u32.u64.compose %v246, %v245
        %v248 = vextract.low.u32 %v247
        %v249 = vextract.high.u32 %v247
        %v250 = vmul.u32.u64.compose %v246, %v241
        %v251 = vextract.low.u32 %v250
        %v252 = vextract.high.u32 %v250
        %v253 = vmul.u32 %v246, %v237
        %v254 = vadd.s32 %v249, %v251
        %vm255 = vc.u32 %v249, %v251
        %v256 = vadd.s32 %v252, 1
        %v257 = vsel %vm255, %v256, %v252
        %v258 = vadd.s32 %v253, %v257
        %v259 = vadd.s32 %v258, 536870912
        %v260 = vshrl.u32 %v259, 30
        %v261 = vshll.u32 %v260, 30
        %v262 = vsub.s32 %v258, %v261
        %vm263 = vcmp.lt.s32.totalorder %v262, 0
        %v264 = vsub.s32 0, %v262
        %v265 = vsel %vm263, %v264, %v262
        %v266 = vclz %v265
        %v267 = vsub.s32 %v266, 2
        %vm268 = vcmp.gt.s32.totalorder 0, %v267
        %v269 = vsel %vm268, 0, %v267
        %v270 = vsub.s32 32, %v269
        %v271 = vshll.u32 %v262, %v269
        %v272 = vshrl.u32 %v254, %v270
        %v273 = vor.u32 %v271, %v272
        %v274 = vsub.s32 4294967266, %v269
        %v275 = vadd.s32 %v274, 127
        %v276 = vshll.u32 %v275, 23
        %v277 = vor.u32 4788187, %v276
        %v278 = vand.u32 2147483647, %v277
        %v280 = vcvt.s32.f32 %v273
        %v281 = vmul.f32 %v280, %v278
        %v282 = vxor.u32 %v281, 2147483648
        %v283 = vsel %vm200, %v282, %v281
        %v284 = vsub.s32 4, %v260
        %v285 = vsel %vm200, %v284, %v260
        %v286 = vsel %vm199, %v197, %v283
        %v287 = vsel %vm199, 0, %v285
        %v288 = vcosq.f32.pop %v286
        %v289 = vsinq.f32.pop %v286
        %vm290 = vweird.f32 %v197
        %v291 = vand.u32 %v287, 3
        %vm292 = vcmp.lt.s32.totalorder %v291, 2
        %vm293 = vcmp.eq.s32.totalorder %v291, 0
        %v294 = vxor.u32 %v289, 2147483648
        %v295 = vsel %vm293, %v288, %v294
        %vm296 = vcmp.eq.s32.totalorder %v291, 2
        %v297 = vxor.u32 %v288, 2147483648
        %v298 = vsel %vm296, %v297, %v289
        %v299 = vsel %vm292, %v295, %v298
        %v300 = vsel %vm290, nan, %v299
        %v301 = vand.u32 2147483647, %v197
        %vm302 = vcmp.le.f32.partialorder %v301, 0.7853982
        %vm303 = vcmp.lt.s32.totalorder %v197, 0
        %v304 = vand.u32 %v197, 2139095040
        %v305 = vshrl.u32 %v304, 23
        %v306 = vsub.s32 %v305, 127
        %v307 = vand.u32 2147483647, %v197
        %v308 = vand.u32 %v307, 8388607
        %v309 = vor.u32 %v308, 8388608
        %v310 = vsub.s32 0, %v309
        %v311 = vadd.s32 %v306, 1
        %vm312 = vcmp.gt.s32.totalorder %v311, 0
        %v313 = vsel %vm312, %v311, 0
        %v314 = vshrl.u32 %v313, 5
        %v315 = vand.u32 %v313, 31
        %v316 = vsub.s32 32, %v315
        %v317 = vshrl.u32 683565275, %v316
        %v318 = vshll.u32 683565275, %v315
        %v319 = vshrl.u32 2475754826, %v316
        %v320 = vor.u32 %v318, %v319
        %v321 = vshll.u32 2475754826, %v315
        %v322 = vshrl.u32 2131351028, %v316
        %v323 = vor.u32 %v321, %v322
        %v324 = vshll.u32 2131351028, %v315
        %v325 = vshrl.u32 2102212464, %v316
        %v326 = vor.u32 %v324, %v325
        %v327 = vshll.u32 2102212464, %v315
        %v328 = vshrl.u32 920167782, %v316
        %v329 = vor.u32 %v327, %v328
        %v330 = vshll.u32 920167782, %v315
        %v331 = vshrl.u32 1326507024, %v316
        %v332 = vor.u32 %v330, %v331
        %vm333 = vcmp.lt.s32.totalorder %v314, 1
        %vm334 = vcmp.lt.s32.totalorder %v314, 2
        %vm335 = vcmp.lt.s32.totalorder %v314, 3
        %vm336 = vcmp.lt.s32.totalorder %v314, 4
        %v337 = vsel %vm333, %v317, %v320
        %v338 = vsel %vm336, %v326, 2102212464
        %v339 = vsel %vm335, %v323, %v338
        %v340 = vsel %vm334, %v337, %v339
        %v341 = vsel %vm333, %v320, %v323
        %v342 = vsel %vm336, %v329, 920167782
        %v343 = vsel %vm335, %v326, %v342
        %v344 = vsel %vm334, %v341, %v343
        %v345 = vsel %vm333, %v323, %v326
        %v346 = vsel %vm336, %v332, 1326507024
        %v347 = vsel %vm335, %v329, %v346
        %v348 = vsel %vm334, %v345, %v347
        %v349 = vshll.u32 %v309, 8
        %v350 = vmul.u32.u64.compose %v349, %v348
        %v351 = vextract.low.u32 %v350
        %v352 = vextract.high.u32 %v350
        %v353 = vmul.u32.u64.compose %v349, %v344
        %v354 = vextract.low.u32 %v353
        %v355 = vextract.high.u32 %v353
        %v356 = vmul.u32 %v349, %v340
        %v357 = vadd.s32 %v352, %v354
        %vm358 = vc.u32 %v352, %v354
        %v359 = vadd.s32 %v355, 1
        %v360 = vsel %vm358, %v359, %v355
        %v361 = vadd.s32 %v356, %v360
        %v362 = vadd.s32 %v361, 536870912
        %v363 = vshrl.u32 %v362, 30
        %v364 = vshll.u32 %v363, 30
        %v365 = vsub.s32 %v361, %v364
        %vm366 = vcmp.lt.s32.totalorder %v365, 0
        %v367 = vsub.s32 0, %v365
        %v368 = vsel %vm366, %v367, %v365
        %v369 = vclz %v368
        %v370 = vsub.s32 %v369, 2
        %vm371 = vcmp.gt.s32.totalorder 0, %v370
        %v372 = vsel %vm371, 0, %v370
        %v373 = vsub.s32 32, %v372
        %v374 = vshll.u32 %v365, %v372
        %v375 = vshrl.u32 %v357, %v373
        %v376 = vor.u32 %v374, %v375
        %v377 = vsub.s32 4294967266, %v372
        %v378 = vadd.s32 %v377, 127
        %v379 = vshll.u32 %v378, 23
        %v380 = vor.u32 4788187, %v379
        %v381 = vand.u32 2147483647, %v380
        %v383 = vcvt.s32.f32 %v376
        %v384 = vmul.f32 %v383, %v381
        %v385 = vxor.u32 %v384, 2147483648
        %v386 = vsel %vm303, %v385, %v384
        %v387 = vsub.s32 4, %v363
        %v388 = vsel %vm303, %v387, %v363
        %v389 = vsel %vm302, %v197, %v386
        %v390 = vsel %vm302, 0, %v388
        %v391 = vcosq.f32.pop %v389
        %v392 = vsinq.f32.pop %v389
        %vm393 = vweird.f32 %v197
        %v394 = vadd.s32 %v390, 3
        %v395 = vand.u32 %v394, 3
        %vm396 = vcmp.lt.s32.totalorder %v395, 2
        %vm397 = vcmp.eq.s32.totalorder %v395, 0
        %v398 = vxor.u32 %v392, 2147483648
        %v399 = vsel %vm397, %v391, %v398
        %vm400 = vcmp.eq.s32.totalorder %v395, 2
        %v401 = vxor.u32 %v391, 2147483648
        %v402 = vsel %vm400, %v401, %v392
        %v403 = vsel %vm396, %v399, %v402
        %v404 = vsel %vm393, nan, %v403
        %v405 = vmul.f32 %v183, %v404
        %406 = vrot.lane.b32.xlu0 %v405, 127
        %v407 = vpop.permute.xlu0 %406
        %408 = vrot.lane.b32.xlu0 %v405, 1
        %v409 = vpop.permute.xlu0 %408
        %v410 = vlaneseq
        %v411 = vand.u32 %v410, 127
        %v412 = vand.u32 %v411, 1
        %vm413 = vcmp.eq.s32.totalorder %v412, 0
        %v414 = vsel %vm413, 1, 0
        %vm415 = vcmp.eq.s32.totalorder %v414, 1
        %v416 = vsel %vm415, %v407, %v409
        %v417 = vmul.f32 %v183, %v300
        %v418 = vadd.f32 %v417, %v416
        %419 = vst [vmem:[%s174] sm:$0xff] %v418
        %s420 = sand.u32 %s98, 1
        %s421 = scalar_lea.sflag [#allocation3], %s420
        %s422 = sand.u32 %s98, 1
        %s423 = smul.addr %s422, 8
        %s424 = scalar_lea.vmem [#allocation2], %s423
        // Predicated region
        $region33: #{tpu_custom_call.1} parent=31 // pred_check
          %p425 = pneg %p108
        $region34: #{tpu_custom_call.1} parent=31 // pred_check_branch
          %427 = sbr.rel (%p425) target = $region36
        $region35: #{tpu_custom_call.1} parent=31 // pred_region
          %s429 = ssub.s32 128, 128
          %430 = vsyncadd %s421, %s429
          %s431 = smul.addr %s17, 128
          %s432 = scalar_lea.hbm %s3, %s431
          %s434 = sshll.u32 %s424, 4
          %s435 = int_to_ptr.vmem [resolvable:$true] %s434
          %437 = dma.vmem_to_hbm [thread:$0]  %s435, 128, %s432, %s421
        $region36: #{tpu_custom_call.1} parent=31 // pred_fallthru
          _
      $region32: #{tpu_custom_call.1} parent=5 // pred_fallthru
        _
      %p438 = scmp.le.s32.totalorder 2, %s12
      // Predicated region
      $region37: #{tpu_custom_call.1} parent=5 // pred_check
        %p439 = pneg %p438
      $region38: #{tpu_custom_call.1} parent=5 // pred_check_branch
        %441 = sbr.rel (%p439) target = $region40
      $region39: #{tpu_custom_call.1} parent=5 // pred_region
        %s442 = ssub.s32 %s12, 2
        // Predicated region
        $region41: #{tpu_custom_call.1} parent=39 // pred_check
          %p443 = pneg %p114
        $region42: #{tpu_custom_call.1} parent=39 // pred_check_branch
          %445 = sbr.rel (%p443) target = $region44
        $region43: #{tpu_custom_call.1} parent=39 // pred_region
          %s446 = sand.u32 %s99, 1
          %s447 = scalar_lea.sflag [#allocation3], %s446
          %s448 = sand.u32 %s99, 1
          %s449 = smul.addr %s448, 8
          %s450 = scalar_lea.vmem [#allocation2], %s449
          %451 = dma.done %s447, 128
        $region44: #{tpu_custom_call.1} parent=39 // pred_fallthru
          _
      $region40: #{tpu_custom_call.1} parent=5 // pred_fallthru
        _
    $region6: #{tpu_custom_call.1} parent=1 // loop_footer
      %s16 = sadd.s32 1, %s12
    $region7: #{tpu_custom_call.1} parent=1 // loop_footer_branch
      %11 = sbr.rel target = $region3
    $region8: #{tpu_custom_call.1} parent=1 // loop_exit
      _
    %452 = vsyncpa [#allocation3], 1
    %s453 = scalar_lea.sflag [#allocation3], 1
    %454 = vsyncpa %s453, 1

</llo_original>
